<compile_context>
chip_gen: v7x
topology: tpu7x:2x2x1
jax: 0.10.0
libtpu: 0.0.40
codegen_flags: <defaults>
</compile_context>

<pallas_src>
from functools import partial

import jax
import jax.numpy as jnp
from jax.experimental import pallas as pl
from jax.experimental.pallas import tpu as pltpu


def _round_up(n, m):
    return ((n + m - 1) // m) * m


def _frfm_kernel(x_ref, w_ref, b_ref, id_ref, age_ref, gen_ref):
    D = id_ref.shape[-1]
    x = x_ref[...]                                    # (tm, D), input dtype

    # Matmul in the narrower of (x, w) dtypes -> MXU fast path when either is
    # bf16; accumulation stays f32 on the MXU.
    if jnp.dtype(x_ref.dtype).itemsize <= jnp.dtype(w_ref.dtype).itemsize:
        mm_dtype = x_ref.dtype
    else:
        mm_dtype = w_ref.dtype
    y = jnp.dot(x.astype(mm_dtype), w_ref[...].astype(mm_dtype),
                preferred_element_type=jnp.float32)    # (tm, 2D) f32
    y = jnp.maximum(y + b_ref[...].astype(jnp.float32), 0.0)  # bias + ReLU, f32

    age = y[:, :D]                                    # static lane-tile slices
    gen = y[:, D:]
    idp = x.astype(jnp.float32) - age - gen           # residual in f32

    id_ref[...] = idp.astype(id_ref.dtype)
    age_ref[...] = age.astype(age_ref.dtype)
    gen_ref[...] = gen.astype(gen_ref.dtype)


def prepare_frfm_params(wa, ba, wg, bg, *, matmul_dtype=None):
    """Transpose + fuse the two nn.Linear params ONCE (hoisted out of forward).

    wa/wg: (D, D) PyTorch-layout weights (out_features, in_features).
    ba/bg: (D,) biases.
    Returns (w_fused (D, 2D), b_fused (1, 2D) f32).  Optionally cast the fused
    weight to bf16 for the MXU fast path (accumulation stays f32).
    """
    D = wa.shape[0]
    assert D % 128 == 0, "embedding_size must be a multiple of 128 for lane-dense tiles"
    w_fused = jnp.concatenate([wa.T, wg.T], axis=1)           # (D, 2D)
    if matmul_dtype is not None:
        w_fused = w_fused.astype(matmul_dtype)
    b_fused = jnp.concatenate([ba, bg]).reshape(1, 2 * D).astype(jnp.float32)
    return w_fused, b_fused


@partial(jax.jit, static_argnames=("tm", "out_dtype", "vmem_limit_bytes"))
def frfm_forward(x, w_fused, b_fused, *, tm=512, out_dtype=None,
                 vmem_limit_bytes=None):
    """x: (B, D).  w_fused: (D, 2D).  b_fused: (1, 2D) f32.

    Returns (id, age, gender), each (B, D) in `out_dtype` (default: x.dtype).
    """
    B, D = x.shape
    assert D % 128 == 0, "embedding_size must be a multiple of 128"
    assert w_fused.shape == (D, 2 * D)
    assert b_fused.shape == (1, 2 * D)
    out_dt = jnp.dtype(out_dtype) if out_dtype is not None else x.dtype

    # Effective batch tile: multiple of 8 sublanes, <= requested tm, and
    # clamped so the grid has >= 2 steps (keeps both v7x TensorCores busy).
    # No padding: Pallas handles the ragged last block (OOB writes dropped).
    tm_eff = max(8, min(_round_up(tm, 8), _round_up(pl.cdiv(B, 2), 8)))
    grid = (pl.cdiv(B, tm_eff),)

    row_spec = pl.BlockSpec((tm_eff, D), lambda i: (i, 0))
    # Weight / bias block index is constant across the grid -> single-buffer.
    w_spec = pl.BlockSpec((D, 2 * D), lambda i: (0, 0),
                          pipeline_mode=pl.Buffered(1))
    b_spec = pl.BlockSpec((1, 2 * D), lambda i: (0, 0),
                          pipeline_mode=pl.Buffered(1))

    out_sd = jax.ShapeDtypeStruct((B, D), out_dt)

    return pl.pallas_call(
        _frfm_kernel,
        out_shape=(out_sd, out_sd, out_sd),
        grid_spec=pltpu.PrefetchScalarGridSpec(
            num_scalar_prefetch=0,
            grid=grid,
            in_specs=[row_spec, w_spec, b_spec],
            out_specs=[row_spec, row_spec, row_spec],
        ),
        compiler_params=pltpu.CompilerParams(
            dimension_semantics=("parallel",),
            vmem_limit_bytes=vmem_limit_bytes,
        ),
    )(x, w_fused, b_fused)


def _reference(x, wa, ba, wg, bg):
    age = jnp.maximum(x @ wa.T + ba, 0.0)
    gen = jnp.maximum(x @ wg.T + bg, 0.0)
    return x - age - gen, age, gen


if __name__ == "__main__":
    # Ragged batch (not a multiple of the tile) + lane-aligned embedding dim.
    B, D = 200, 256
    key = jax.random.PRNGKey(0)
    kx, kwa, kba, kwg, kbg = jax.random.split(key, 5)

    x = jax.random.normal(kx, (B, D), dtype=jnp.float32)
    scale = 1.0 / jnp.sqrt(jnp.float32(D))
    wa = jax.random.uniform(kwa, (D, D), jnp.float32, -scale, scale)
    ba = jax.random.uniform(kba, (D,), jnp.float32, -scale, scale)
    wg = jax.random.uniform(kwg, (D, D), jnp.float32, -scale, scale)
    bg = jax.random.uniform(kbg, (D,), jnp.float32, -scale, scale)

    id_r, age_r, gen_r = _reference(x, wa, ba, wg, bg)

    # Exact f32 path (matches the PyTorch module numerics).  The tile clamps
    # to ceil(200/2)=100 -> 104 rows, so the grid has 2 "parallel" steps.
    w_f, b_f = prepare_frfm_params(wa, ba, wg, bg)
    id_e, age_e, gen_e = frfm_forward(x, w_f, b_f)
    jax.block_until_ready((id_e, age_e, gen_e))

    assert id_e.shape == (B, D) and age_e.shape == (B, D) and gen_e.shape == (B, D)
    assert jnp.allclose(id_e, id_r, atol=1e-5, rtol=1e-5)
    assert jnp.allclose(age_e, age_r, atol=1e-5, rtol=1e-5)
    assert jnp.allclose(gen_e, gen_r, atol=1e-5, rtol=1e-5)

    # bf16-weight fast path (v5e/v6e/v7x MXU rate): accumulation stays f32.
    w_bf, b_bf = prepare_frfm_params(wa, ba, wg, bg, matmul_dtype=jnp.bfloat16)
    id_b, age_b, gen_b = frfm_forward(x, w_bf, b_bf)
    jax.block_until_ready((id_b, age_b, gen_b))
    assert jnp.allclose(age_b, age_r, atol=1e-1, rtol=1e-1)
    assert jnp.allclose(gen_b, gen_r, atol=1e-1, rtol=1e-1)
    assert jnp.allclose(id_b, id_r, atol=1e-1, rtol=1e-1)

    # bf16 outputs (halves the dominant HBM write traffic); arithmetic is f32.
    id_h, age_h, gen_h = frfm_forward(x, w_f, b_f, out_dtype=jnp.bfloat16)
    jax.block_until_ready((id_h, age_h, gen_h))
    assert id_h.dtype == jnp.bfloat16
    assert jnp.allclose(id_h.astype(jnp.float32), id_r, atol=5e-2, rtol=5e-2)

    print("KERNEL_OK")
</pallas_src>

<mosaic_0001>
module attributes {stable_mosaic.version = 11 : i64} {
  func.func @_frfm_kernel(%arg0: i32, %arg1: memref<104x256xf32, #tpu.memory_space<vmem>>, %arg2: memref<256x512xf32, #tpu.memory_space<vmem>>, %arg3: memref<1x512xf32, #tpu.memory_space<vmem>>, %arg4: memref<104x256xf32, #tpu.memory_space<vmem>>, %arg5: memref<104x256xf32, #tpu.memory_space<vmem>>, %arg6: memref<104x256xf32, #tpu.memory_space<vmem>>) attributes {dimension_semantics = [#tpu.dimension_semantics<parallel>], iteration_bounds = array<i64: 2>, scalar_prefetch = 0 : i64, scratch_operands = 0 : i64, tpu.core_type = #tpu.core_type<tc>, window_params = [{transform_indices = @transform_0, window_bounds = array<i64: 104, 256>}, {pipeline_mode = #tpu.pipeline_mode<synchronous>, transform_indices = @transform_1, window_bounds = array<i64: 256, 512>}, {pipeline_mode = #tpu.pipeline_mode<synchronous>, transform_indices = @transform_2, window_bounds = array<i64: 1, 512>}, {transform_indices = @transform_3, window_bounds = array<i64: 104, 256>}, {transform_indices = @transform_4, window_bounds = array<i64: 104, 256>}, {transform_indices = @transform_5, window_bounds = array<i64: 104, 256>}]} {
    %c0 = arith.constant 0 : index
    %c0_0 = arith.constant 0 : index
    %0 = vector.load %arg1[%c0, %c0_0] : memref<104x256xf32, #tpu.memory_space<vmem>>, vector<104x256xf32>
    %c0_1 = arith.constant 0 : index
    %c0_2 = arith.constant 0 : index
    %1 = vector.load %arg2[%c0_1, %c0_2] : memref<256x512xf32, #tpu.memory_space<vmem>>, vector<256x512xf32>
    %cst = arith.constant dense<0.000000e+00> : vector<104x512xf32>
    %2 = tpu.matmul %0, %1, %cst {dimension_numbers = #tpu.dot_dimension_numbers<[1], [0], [0], [1], [0, 0, 1, 1], [], []>} : vector<104x256xf32>, vector<256x512xf32>, vector<104x512xf32> -> vector<104x512xf32>
    %c0_3 = arith.constant 0 : index
    %c0_4 = arith.constant 0 : index
    %3 = vector.load %arg3[%c0_3, %c0_4] : memref<1x512xf32, #tpu.memory_space<vmem>>, vector<1x512xf32>
    %4 = vector.broadcast %3 : vector<1x512xf32> to vector<104x512xf32>
    %5 = arith.addf %2, %4 : vector<104x512xf32>
    %cst_5 = arith.constant 0.000000e+00 : f32
    %6 = vector.broadcast %cst_5 : f32 to vector<104x512xf32>
    %7 = arith.maximumf %5, %6 : vector<104x512xf32>
    %8 = vector.extract_strided_slice %7 {offsets = [0, 0], sizes = [104, 256], strides = [1, 1]} : vector<104x512xf32> to vector<104x256xf32>
    %9 = vector.extract_strided_slice %7 {offsets = [0, 256], sizes = [104, 256], strides = [1, 1]} : vector<104x512xf32> to vector<104x256xf32>
    %10 = arith.subf %0, %8 : vector<104x256xf32>
    %11 = arith.subf %10, %9 : vector<104x256xf32>
    %c0_6 = arith.constant 0 : index
    %c0_7 = arith.constant 0 : index
    %12 = vector.load %arg4[%c0_6, %c0_7] : memref<104x256xf32, #tpu.memory_space<vmem>>, vector<104x256xf32>
    tpu.vector_store %arg4[%c0_6, %c0_7], %11 {strides = array<i32>} : memref<104x256xf32, #tpu.memory_space<vmem>>, vector<104x256xf32>,
    %c0_8 = arith.constant 0 : index
    %c0_9 = arith.constant 0 : index
    %13 = vector.load %arg5[%c0_8, %c0_9] : memref<104x256xf32, #tpu.memory_space<vmem>>, vector<104x256xf32>
    tpu.vector_store %arg5[%c0_8, %c0_9], %8 {strides = array<i32>} : memref<104x256xf32, #tpu.memory_space<vmem>>, vector<104x256xf32>,
    %c0_10 = arith.constant 0 : index
    %c0_11 = arith.constant 0 : index
    %14 = vector.load %arg6[%c0_10, %c0_11] : memref<104x256xf32, #tpu.memory_space<vmem>>, vector<104x256xf32>
    tpu.vector_store %arg6[%c0_10, %c0_11], %9 {strides = array<i32>} : memref<104x256xf32, #tpu.memory_space<vmem>>, vector<104x256xf32>,
    return
  }
  func.func @transform_0(%arg0: i32) -> (i32, i32) {
    %c0_i32 = arith.constant 0 : i32
    %c0_i32_0 = arith.constant 0 : i32
    return %arg0, %c0_i32 : i32, i32
  }
  func.func @transform_1(%arg0: i32) -> (i32, i32) {
    %c0_i32 = arith.constant 0 : i32
    %c0_i32_0 = arith.constant 0 : i32
    %c0_i32_1 = arith.constant 0 : i32
    return %c0_i32, %c0_i32_0 : i32, i32
  }
  func.func @transform_2(%arg0: i32) -> (i32, i32) {
    %c0_i32 = arith.constant 0 : i32
    %c0_i32_0 = arith.constant 0 : i32
    %c0_i32_1 = arith.constant 0 : i32
    return %c0_i32, %c0_i32_0 : i32, i32
  }
  func.func @transform_3(%arg0: i32) -> (i32, i32) {
    %c0_i32 = arith.constant 0 : i32
    %c0_i32_0 = arith.constant 0 : i32
    return %arg0, %c0_i32 : i32, i32
  }
  func.func @transform_4(%arg0: i32) -> (i32, i32) {
    %c0_i32 = arith.constant 0 : i32
    %c0_i32_0 = arith.constant 0 : i32
    return %arg0, %c0_i32 : i32, i32
  }
  func.func @transform_5(%arg0: i32) -> (i32, i32) {
    %c0_i32 = arith.constant 0 : i32
    %c0_i32_0 = arith.constant 0 : i32
    return %arg0, %c0_i32 : i32, i32
  }
}

</mosaic_0001>

<llo_original>
// kernel: frfm_forward.1
$region0: #{frfm_forward.1}
  #allocation0 [shape = 'u32[]', space=smem, size = 0x4, offset = 0x4, fixed_abs, tag = 'smem constant byte address 0x4 - core index']
  #allocation1 [shape = 'u32[144,128]{1,0:T(1,128)}', space=vmem, size = 0x12000, scoped, tag = 'internal scratch']
  %s0 = inlined_call_operand.hbm [shape: f32[200,256], index: 0, kind: input, shape index: {}]
  %s1 = inlined_call_operand.hbm [shape: f32[256,512], index: 1, kind: input, shape index: {}]
  %s2 = inlined_call_operand.vmem [shape: f32[1,512], index: 2, kind: input, shape index: {}]
  %s3 = inlined_call_operand.hbm [shape: f32[200,256], index: 3, kind: output, shape index: {0}]
  %s4 = inlined_call_operand.hbm [shape: f32[200,256], index: 4, kind: output, shape index: {1}]
  %s5 = inlined_call_operand.hbm [shape: f32[200,256], index: 5, kind: output, shape index: {2}]
  %6 = xla_tuple %s3, %s4, %s5
  %s7 = sld [smem:[#allocation0]]
  $region69: #{frfm_forward.1} parent=0
    _
  %s9 = ssub.s32 1, %s7
  %s10 = scalar_select 0, %s9, %s7
  $region1: #{frfm_forward.1} parent=0
    #allocation2 [shape = 'u8[212992]{0}', space=vmem, size = 0x34000, scoped, tag = 'input window, operand 0']
    #allocation3 [shape = 's32[2]{0}', space=sflag, size = 0x8, scoped, tag = 'scoped memory for frfm_forward.1']
    #allocation4 [shape = 's32[2]{0}', space=sflag, size = 0x8, scoped, tag = 'scoped memory for frfm_forward.1']
    #allocation5 [shape = 'u8[524288]{0}', space=vmem, size = 0x80000, scoped, tag = 'input window, operand 1, single buffered']
    #allocation6 [shape = 's32[1]{0}', space=sflag, size = 0x4, scoped, tag = 'scoped memory for frfm_forward.1']
    #allocation7 [shape = 'u8[212992]{0}', space=vmem, size = 0x34000, scoped, tag = 'output window, operand 0']
    #allocation8 [shape = 'u8[212992]{0}', space=vmem, size = 0x34000, scoped, tag = 'output window, operand 1']
    #allocation9 [shape = 's32[2]{0}', space=sflag, size = 0x8, scoped, tag = 'scoped memory for frfm_forward.1']
    #allocation10 [shape = 'u8[212992]{0}', space=vmem, size = 0x34000, scoped, tag = 'output window, operand 2']
    %11 = vsyncpa [#allocation3], 0
    %s12 = scalar_lea.sflag [#allocation3], 1
    %13 = vsyncpa %s12, 0
    %14 = vsyncpa [#allocation6], 0
    %15 = vsyncpa [#allocation4], 0
    %s16 = scalar_lea.sflag [#allocation4], 1
    %17 = vsyncpa %s16, 0
    %18 = vsyncpa [#allocation9], 0
    %s19 = scalar_lea.sflag [#allocation9], 1
    %20 = vsyncpa %s19, 0
    loop: start=0, step=1, limit=4
    $region2: #{frfm_forward.1} parent=1 // loop_pre_header
      _
    $region3: #{frfm_forward.1} parent=1 // loop_header
      %s22 = sphi 0, %s26
      %p23 = scmp.ge.s32.totalorder %s22, 4
      %s32 = sphi 0, %s34
      %s35 = sphi 0, %s32
      %s36 = sphi 0, %s35
      %s52 = sphi 0, %s36
      %s56 = sphi 0, %s56
      %s58 = sphi 0, %s56
      %s59 = sphi 0, %s58
      %s73 = sphi 0, %s59
      %s77 = sphi 0, %s77
      %s79 = sphi 0, %s77
      %s80 = sphi 0, %s79
      %s94 = sphi 0, %s80
      %s100 = sphi 0, %s102
      %s103 = sphi 0, %s100
      %s104 = sphi 0, %s103
      %s120 = sphi 0, %s104
      %s126 = sphi 0, %s128
      %s129 = sphi 0, %s126
      %s130 = sphi 0, %s129
      %s146 = sphi 0, %s130
      %s152 = sphi 0, %s154
      %s155 = sphi 0, %s152
      %s156 = sphi 0, %s155
      %s172 = sphi 0, %s156
    $region4: #{frfm_forward.1} parent=1 // loop_header_branch
      %25 = sbr.rel (%p23) target = $region8
    $region5: #{frfm_forward.1} parent=1 // loop_body
      %s27 = ssub.s32 %s22, 1
      %s28 = ssub.s32 %s22, 2
      %s29 = sadd.s32 %s22, 1
      %s30 = ssub.s32 %s22, %s29
      %p31 = scmp.eq.s32.totalorder %s30, 0
      %s33 = sadd.s32 %s32, 1
      %s34 = scalar_select %p31, %s32, %s33
      %p37 = pneg %p31
      %p38 = scmp.eq.s32.totalorder %s22, 1
      %p39 = por %p37, %p38
      %p40 = scmp.ne.s32.totalorder %s32, %s35
      %p41 = scmp.eq.s32.totalorder %s22, 0
      %p42 = por %p40, %p41
      %p43 = scmp.ne.s32.totalorder %s32, %s35
      %p44 = scmp.eq.s32.totalorder %s27, 1
      %p45 = por %p43, %p44
      %p46 = scmp.ne.s32.totalorder %s35, %s36
      %p47 = scmp.eq.s32.totalorder %s27, 0
      %p48 = por %p46, %p47
      %p49 = scmp.ne.s32.totalorder %s35, %s36
      %p50 = scmp.eq.s32.totalorder %s28, 1
      %p51 = por %p49, %p50
      %p53 = scmp.ne.s32.totalorder %s36, %s52
      %p54 = scmp.eq.s32.totalorder %s28, 0
      %p55 = por %p53, %p54
      %s57 = sadd.s32 %s56, 1
      %p60 = scmp.eq.s32.totalorder %s22, 1
      %p61 = scmp.ne.s32.totalorder %s56, %s58
      %p62 = scmp.eq.s32.totalorder %s22, 0
      %p63 = por %p61, %p62
      %p64 = scmp.ne.s32.totalorder %s56, %s58
      %p65 = scmp.eq.s32.totalorder %s27, 1
      %p66 = por %p64, %p65
      %p67 = scmp.ne.s32.totalorder %s58, %s59
      %p68 = scmp.eq.s32.totalorder %s27, 0
      %p69 = por %p67, %p68
      %p70 = scmp.ne.s32.totalorder %s58, %s59
      %p71 = scmp.eq.s32.totalorder %s28, 1
      %p72 = por %p70, %p71
      %p74 = scmp.ne.s32.totalorder %s59, %s73
      %p75 = scmp.eq.s32.totalorder %s28, 0
      %p76 = por %p74, %p75
      %s78 = sadd.s32 %s77, 1
      %p81 = scmp.eq.s32.totalorder %s22, 1
      %p82 = scmp.ne.s32.totalorder %s77, %s79
      %p83 = scmp.eq.s32.totalorder %s22, 0
      %p84 = por %p82, %p83
      %p85 = scmp.ne.s32.totalorder %s77, %s79
      %p86 = scmp.eq.s32.totalorder %s27, 1
      %p87 = por %p85, %p86
      %p88 = scmp.ne.s32.totalorder %s79, %s80
      %p89 = scmp.eq.s32.totalorder %s27, 0
      %p90 = por %p88, %p89
      %p91 = scmp.ne.s32.totalorder %s79, %s80
      %p92 = scmp.eq.s32.totalorder %s28, 1
      %p93 = por %p91, %p92
      %p95 = scmp.ne.s32.totalorder %s80, %s94
      %p96 = scmp.eq.s32.totalorder %s28, 0
      %p97 = por %p95, %p96
      %s98 = ssub.s32 %s22, %s29
      %p99 = scmp.eq.s32.totalorder %s98, 0
      %s101 = sadd.s32 %s100, 1
      %s102 = scalar_select %p99, %s100, %s101
      %p105 = pneg %p99
      %p106 = scmp.eq.s32.totalorder %s22, 1
      %p107 = por %p105, %p106
      %p108 = scmp.ne.s32.totalorder %s100, %s103
      %p109 = scmp.eq.s32.totalorder %s22, 0
      %p110 = por %p108, %p109
      %p111 = scmp.ne.s32.totalorder %s100, %s103
      %p112 = scmp.eq.s32.totalorder %s27, 1
      %p113 = por %p111, %p112
      %p114 = scmp.ne.s32.totalorder %s103, %s104
      %p115 = scmp.eq.s32.totalorder %s27, 0
      %p116 = por %p114, %p115
      %p117 = scmp.ne.s32.totalorder %s103, %s104
      %p118 = scmp.eq.s32.totalorder %s28, 1
      %p119 = por %p117, %p118
      %p121 = scmp.ne.s32.totalorder %s104, %s120
      %p122 = scmp.eq.s32.totalorder %s28, 0
      %p123 = por %p121, %p122
      %s124 = ssub.s32 %s22, %s29
      %p125 = scmp.eq.s32.totalorder %s124, 0
      %s127 = sadd.s32 %s126, 1
      %s128 = scalar_select %p125, %s126, %s127
      %p131 = pneg %p125
      %p132 = scmp.eq.s32.totalorder %s22, 1
      %p133 = por %p131, %p132
      %p134 = scmp.ne.s32.totalorder %s126, %s129
      %p135 = scmp.eq.s32.totalorder %s22, 0
      %p136 = por %p134, %p135
      %p137 = scmp.ne.s32.totalorder %s126, %s129
      %p138 = scmp.eq.s32.totalorder %s27, 1
      %p139 = por %p137, %p138
      %p140 = scmp.ne.s32.totalorder %s129, %s130
      %p141 = scmp.eq.s32.totalorder %s27, 0
      %p142 = por %p140, %p141
      %p143 = scmp.ne.s32.totalorder %s129, %s130
      %p144 = scmp.eq.s32.totalorder %s28, 1
      %p145 = por %p143, %p144
      %p147 = scmp.ne.s32.totalorder %s130, %s146
      %p148 = scmp.eq.s32.totalorder %s28, 0
      %p149 = por %p147, %p148
      %s150 = ssub.s32 %s22, %s29
      %p151 = scmp.eq.s32.totalorder %s150, 0
      %s153 = sadd.s32 %s152, 1
      %s154 = scalar_select %p151, %s152, %s153
      %p157 = pneg %p151
      %p158 = scmp.eq.s32.totalorder %s22, 1
      %p159 = por %p157, %p158
      %p160 = scmp.ne.s32.totalorder %s152, %s155
      %p161 = scmp.eq.s32.totalorder %s22, 0
      %p162 = por %p160, %p161
      %p163 = scmp.ne.s32.totalorder %s152, %s155
      %p164 = scmp.eq.s32.totalorder %s27, 1
      %p165 = por %p163, %p164
      %p166 = scmp.ne.s32.totalorder %s155, %s156
      %p167 = scmp.eq.s32.totalorder %s27, 0
      %p168 = por %p166, %p167
      %p169 = scmp.ne.s32.totalorder %s155, %s156
      %p170 = scmp.eq.s32.totalorder %s28, 1
      %p171 = por %p169, %p170
      %p173 = scmp.ne.s32.totalorder %s156, %s172
      %p174 = scmp.eq.s32.totalorder %s28, 0
      %p175 = por %p173, %p174
      %p176 = scmp.le.s32.totalorder 1, %s22
      %p177 = scmp.lt.s32.totalorder %s22, 3
      %p178 = pnand %p176, %p177
      %p179 = pneg %p178
      // Predicated region
      $region9: #{frfm_forward.1} parent=5 // pred_check
        _
      $region10: #{frfm_forward.1} parent=5 // pred_check_branch
        %181 = sbr.rel (%p178) target = $region12
      $region11: #{frfm_forward.1} parent=5 // pred_region
        %s182 = ssub.s32 %s22, 1
        // Predicated region
        $region13: #{frfm_forward.1} parent=11 // pred_check
          %p183 = pneg %p69
        $region14: #{frfm_forward.1} parent=11 // pred_check_branch
          %185 = sbr.rel (%p183) target = $region16
        $region15: #{frfm_forward.1} parent=11 // pred_region
          %s187 = ssub.s32 16384, 16384
          %188 = vsyncadd [#allocation6], %s187
          %s189 = sshll.u32 [#allocation5], 4
          %s190 = int_to_ptr.vmem [resolvable:$true] %s189
          %195 = dma.hbm_to_vmem [thread:$0]  %s1, 16384, %s190, [#allocation6], 512, 512, 32
        $region16: #{frfm_forward.1} parent=11 // pred_fallthru
          _
        // Predicated region
        $region17: #{frfm_forward.1} parent=11 // pred_check
          %p196 = pneg %p90
        $region18: #{frfm_forward.1} parent=11 // pred_check_branch
          %198 = sbr.rel (%p196) target = $region20
        $region19: #{frfm_forward.1} parent=11 // pred_region
          _
        $region20: #{frfm_forward.1} parent=11 // pred_fallthru
          _
      $region12: #{frfm_forward.1} parent=5 // pred_fallthru
        _
      %p199 = scmp.lt.s32.totalorder %s22, 2
      // Predicated region
      $region21: #{frfm_forward.1} parent=5 // pred_check
        %p200 = pneg %p199
      $region22: #{frfm_forward.1} parent=5 // pred_check_branch
        %202 = sbr.rel (%p200) target = $region24
      $region23: #{frfm_forward.1} parent=5 // pred_region
        // Predicated region
        $region25: #{frfm_forward.1} parent=23 // pred_check
          %p203 = pneg %p42
        $region26: #{frfm_forward.1} parent=23 // pred_check_branch
          %205 = sbr.rel (%p203) target = $region28
        $region27: #{frfm_forward.1} parent=23 // pred_region
          %s206 = sand.u32 %s32, 1
          %s207 = scalar_lea.sflag [#allocation3], %s206
          %s208 = sand.u32 %s32, 1
          %s209 = smul.addr %s208, 208
          %s210 = scalar_lea.vmem [#allocation2], %s209
          %s211 = smul.u32 13, %s22
          %s212 = ssub.s32 25, %s211
          %p213 = scmp.lt.s32.totalorder %s212, 13
          %s214 = scalar_select %p213, %s212, 13
          %s215 = smul.u32 128, %s214
          %s216 = smul.u32 %s215, 2
          %s218 = ssub.s32 3328, %s216
          %219 = vsyncadd %s207, %s218
          %p220 = scmp.ne.s32.totalorder 0, %s216
          %s221 = smul.addr %s211, 2
          %s222 = smul.addr %s221, 128
          %s223 = scalar_lea.hbm %s0, %s222
          %s224 = smul.u32 16, %s214
          %s225 = sshll.u32 %s210, 4
          %s226 = int_to_ptr.vmem [resolvable:$true] %s225
          %s227 = sshll.u32 %s224, 4
          %231 = dma.hbm_to_vmem [thread:$0]  (%p220), %s223, %s227, %s226, %s207, 256, 256, 16
        $region28: #{frfm_forward.1} parent=23 // pred_fallthru
          _
      $region24: #{frfm_forward.1} parent=5 // pred_fallthru
        _
      %p232 = scmp.le.s32.totalorder 1, %s22
      %p233 = scmp.lt.s32.totalorder %s22, 3
      %p234 = pnand %p232, %p233
      %p235 = pneg %p234
      // Predicated region
      $region29: #{frfm_forward.1} parent=5 // pred_check
        _
      $region30: #{frfm_forward.1} parent=5 // pred_check_branch
        %237 = sbr.rel (%p234) target = $region32
      $region31: #{frfm_forward.1} parent=5 // pred_region
        %s238 = ssub.s32 %s22, 1
        %s239 = sand.u32 %s35, 1
        %s240 = scalar_lea.sflag [#allocation3], %s239
        %s241 = sand.u32 %s35, 1
        %s242 = smul.addr %s241, 208
        %s243 = scalar_lea.vmem [#allocation2], %s242
        // Predicated region
        $region33: #{frfm_forward.1} parent=31 // pred_check
          %p244 = pneg %p48
        $region34: #{frfm_forward.1} parent=31 // pred_check_branch
          %246 = sbr.rel (%p244) target = $region36
        $region35: #{frfm_forward.1} parent=31 // pred_region
          %247 = dma.done %s240, 3328
        $region36: #{frfm_forward.1} parent=31 // pred_fallthru
          _
        // Predicated region
        $region37: #{frfm_forward.1} parent=31 // pred_check
          %p248 = pneg %p69
        $region38: #{frfm_forward.1} parent=31 // pred_check_branch
          %250 = sbr.rel (%p248) target = $region40
        $region39: #{frfm_forward.1} parent=31 // pred_region
          %251 = dma.done [#allocation6], 16384
        $region40: #{frfm_forward.1} parent=31 // pred_fallthru
          _
        %s252 = sand.u32 %s35, 1
        %s253 = scalar_lea.sflag [#allocation3], %s252
        %s254 = sand.u32 %s35, 1
        %s255 = smul.addr %s254, 208
        %s256 = scalar_lea.vmem [#allocation2], %s255
        %p257 = pneg %p48
        %p258 = pneg %p45
        %p259 = pneg %p69
        %p260 = pneg %p66
        %p261 = pneg %p90
        %p262 = pneg %p87
        %p263 = pneg %p116
        %p264 = pneg %p113
        %s265 = sand.u32 %s103, 1
        %s266 = scalar_lea.sflag [#allocation4], %s265
        %s267 = sand.u32 %s103, 1
        %s268 = smul.addr %s267, 208
        %s269 = scalar_lea.vmem [#allocation7], %s268
        %p270 = pneg %p142
        %p271 = pneg %p139
        %s272 = sand.u32 %s27, 1
        %s273 = scalar_lea.sflag [#allocation9], %s272
        %s274 = sand.u32 %s129, 1
        %s275 = smul.addr %s274, 208
        %s276 = scalar_lea.vmem [#allocation8], %s275
        %p277 = pneg %p168
        %p278 = pneg %p165
        %s279 = sand.u32 %s27, 1
        %s280 = scalar_lea.sflag [#allocation9], %s279
        %s281 = sand.u32 %s155, 1
        %s282 = smul.addr %s281, 208
        %s283 = scalar_lea.vmem [#allocation10], %s282
        %s284 = smul.u32 13, %s27
        %s285 = ssub.s32 25, %s284
        %p286 = scmp.lt.s32.totalorder %s285, 13
        %s287 = scalar_select %p286, %s285, 13
        %s288 = smul.u32 128, %s287
        %s289 = smul.u32 %s288, 2
        %s290 = smul.u32 13, %s27
        %s291 = ssub.s32 25, %s290
        %p292 = scmp.lt.s32.totalorder %s291, 13
        %s293 = scalar_select %p292, %s291, 13
        %s294 = smul.u32 128, %s293
        %s295 = smul.u32 %s294, 2
        %s296 = smul.u32 13, %s27
        %s297 = ssub.s32 25, %s296
        %p298 = scmp.lt.s32.totalorder %s297, 13
        %s299 = scalar_select %p298, %s297, 13
        %s300 = smul.u32 128, %s299
        %s301 = smul.u32 %s300, 2
        %s302 = smul.u32 13, %s27
        %s303 = ssub.s32 25, %s302
        %p304 = scmp.lt.s32.totalorder %s303, 13
        %s305 = scalar_select %p304, %s303, 13
        %s306 = smul.u32 128, %s305
        %s307 = smul.u32 %s306, 2
        %v308 = vld [vmem:[%s243] sm:$0xff]
        %v309 = vld [vmem:[%s243 + $0x8] sm:$0xff]
        %v310 = vld [vmem:[%s243 + $0x10] sm:$0xff]
        %v311 = vld [vmem:[%s243 + $0x18] sm:$0xff]
        %v312 = vld [vmem:[%s243 + $0x20] sm:$0xff]
        %v313 = vld [vmem:[%s243 + $0x28] sm:$0xff]
        %v314 = vld [vmem:[%s243 + $0x30] sm:$0xff]
        %v315 = vld [vmem:[%s243 + $0x38] sm:$0xff]
        %v316 = vld [vmem:[%s243 + $0x40] sm:$0xff]
        %v317 = vld [vmem:[%s243 + $0x48] sm:$0xff]
        %v318 = vld [vmem:[%s243 + $0x50] sm:$0xff]
        %v319 = vld [vmem:[%s243 + $0x58] sm:$0xff]
        %v320 = vld [vmem:[%s243 + $0x60] sm:$0xff]
        %v321 = vld [vmem:[%s243 + $0x68] sm:$0xff]
        %v322 = vld [vmem:[%s243 + $0x70] sm:$0xff]
        %v323 = vld [vmem:[%s243 + $0x78] sm:$0xff]
        %v324 = vld [vmem:[%s243 + $0x80] sm:$0xff]
        %v325 = vld [vmem:[%s243 + $0x88] sm:$0xff]
        %v326 = vld [vmem:[%s243 + $0x90] sm:$0xff]
        %v327 = vld [vmem:[%s243 + $0x98] sm:$0xff]
        %v328 = vld [vmem:[%s243 + $0xa0] sm:$0xff]
        %v329 = vld [vmem:[%s243 + $0xa8] sm:$0xff]
        %v330 = vld [vmem:[%s243 + $0xb0] sm:$0xff]
        %v331 = vld [vmem:[%s243 + $0xb8] sm:$0xff]
        %v332 = vld [vmem:[%s243 + $0xc0] sm:$0xff]
        %v333 = vld [vmem:[%s243 + $0xc8] sm:$0xff]
        %v334 = vld [vmem:[#allocation5] sm:$0xff]
        %v335 = vld [vmem:[#allocation5 + $0x8] sm:$0xff]
        %v336 = vld [vmem:[#allocation5 + $0x10] sm:$0xff]
        %v337 = vld [vmem:[#allocation5 + $0x18] sm:$0xff]
        %v338 = vld [vmem:[#allocation5 + $0x20] sm:$0xff]
        %v339 = vld [vmem:[#allocation5 + $0x28] sm:$0xff]
        %v340 = vld [vmem:[#allocation5 + $0x30] sm:$0xff]
        %v341 = vld [vmem:[#allocation5 + $0x38] sm:$0xff]
        %v342 = vld [vmem:[#allocation5 + $0x40] sm:$0xff]
        %v343 = vld [vmem:[#allocation5 + $0x48] sm:$0xff]
        %v344 = vld [vmem:[#allocation5 + $0x50] sm:$0xff]
        %v345 = vld [vmem:[#allocation5 + $0x58] sm:$0xff]
        %v346 = vld [vmem:[#allocation5 + $0x60] sm:$0xff]
        %v347 = vld [vmem:[#allocation5 + $0x68] sm:$0xff]
        %v348 = vld [vmem:[#allocation5 + $0x70] sm:$0xff]
        %v349 = vld [vmem:[#allocation5 + $0x78] sm:$0xff]
        %v350 = vld [vmem:[#allocation5 + $0x80] sm:$0xff]
        %v351 = vld [vmem:[#allocation5 + $0x88] sm:$0xff]
        %v352 = vld [vmem:[#allocation5 + $0x90] sm:$0xff]
        %v353 = vld [vmem:[#allocation5 + $0x98] sm:$0xff]
        %v354 = vld [vmem:[#allocation5 + $0xa0] sm:$0xff]
        %v355 = vld [vmem:[#allocation5 + $0xa8] sm:$0xff]
        %v356 = vld [vmem:[#allocation5 + $0xb0] sm:$0xff]
        %v357 = vld [vmem:[#allocation5 + $0xb8] sm:$0xff]
        %v358 = vld [vmem:[#allocation5 + $0xc0] sm:$0xff]
        %v359 = vld [vmem:[#allocation5 + $0xc8] sm:$0xff]
        %v360 = vld [vmem:[#allocation5 + $0xd0] sm:$0xff]
        %v361 = vld [vmem:[#allocation5 + $0xd8] sm:$0xff]
        %v362 = vld [vmem:[#allocation5 + $0xe0] sm:$0xff]
        %v363 = vld [vmem:[#allocation5 + $0xe8] sm:$0xff]
        %v364 = vld [vmem:[#allocation5 + $0xf0] sm:$0xff]
        %v365 = vld [vmem:[#allocation5 + $0xf8] sm:$0xff]
        %v366 = vld [vmem:[#allocation5 + $0x100] sm:$0xff]
        %v367 = vld [vmem:[#allocation5 + $0x108] sm:$0xff]
        %v368 = vld [vmem:[#allocation5 + $0x110] sm:$0xff]
        %v369 = vld [vmem:[#allocation5 + $0x118] sm:$0xff]
        %v370 = vld [vmem:[#allocation5 + $0x120] sm:$0xff]
        %v371 = vld [vmem:[#allocation5 + $0x128] sm:$0xff]
        %v372 = vld [vmem:[#allocation5 + $0x130] sm:$0xff]
        %v373 = vld [vmem:[#allocation5 + $0x138] sm:$0xff]
        %v374 = vld [vmem:[#allocation5 + $0x140] sm:$0xff]
        %v375 = vld [vmem:[#allocation5 + $0x148] sm:$0xff]
        %v376 = vld [vmem:[#allocation5 + $0x150] sm:$0xff]
        %v377 = vld [vmem:[#allocation5 + $0x158] sm:$0xff]
        %v378 = vld [vmem:[#allocation5 + $0x160] sm:$0xff]
        %v379 = vld [vmem:[#allocation5 + $0x168] sm:$0xff]
        %v380 = vld [vmem:[#allocation5 + $0x170] sm:$0xff]
        %v381 = vld [vmem:[#allocation5 + $0x178] sm:$0xff]
        %v382 = vld [vmem:[#allocation5 + $0x180] sm:$0xff]
        %v383 = vld [vmem:[#allocation5 + $0x188] sm:$0xff]
        %v384 = vld [vmem:[#allocation5 + $0x190] sm:$0xff]
        %v385 = vld [vmem:[#allocation5 + $0x198] sm:$0xff]
        %v386 = vld [vmem:[#allocation5 + $0x1a0] sm:$0xff]
        %v387 = vld [vmem:[#allocation5 + $0x1a8] sm:$0xff]
        %v388 = vld [vmem:[#allocation5 + $0x1b0] sm:$0xff]
        %v389 = vld [vmem:[#allocation5 + $0x1b8] sm:$0xff]
        %v390 = vld [vmem:[#allocation5 + $0x1c0] sm:$0xff]
        %v391 = vld [vmem:[#allocation5 + $0x1c8] sm:$0xff]
        %v392 = vld [vmem:[#allocation5 + $0x1d0] sm:$0xff]
        %v393 = vld [vmem:[#allocation5 + $0x1d8] sm:$0xff]
        %v394 = vld [vmem:[#allocation5 + $0x1e0] sm:$0xff]
        %v395 = vld [vmem:[#allocation5 + $0x1e8] sm:$0xff]
        %v396 = vld [vmem:[#allocation5 + $0x1f0] sm:$0xff]
        %v397 = vld [vmem:[#allocation5 + $0x1f8] sm:$0xff]
        %v398 = vld [vmem:[#allocation5 + $0x200] sm:$0xff]
        %v399 = vld [vmem:[#allocation5 + $0x208] sm:$0xff]
        %v400 = vld [vmem:[#allocation5 + $0x210] sm:$0xff]
        %v401 = vld [vmem:[#allocation5 + $0x218] sm:$0xff]
        %v402 = vld [vmem:[#allocation5 + $0x220] sm:$0xff]
        %v403 = vld [vmem:[#allocation5 + $0x228] sm:$0xff]
        %v404 = vld [vmem:[#allocation5 + $0x230] sm:$0xff]
        %v405 = vld [vmem:[#allocation5 + $0x238] sm:$0xff]
        %v406 = vld [vmem:[#allocation5 + $0x240] sm:$0xff]
        %v407 = vld [vmem:[#allocation5 + $0x248] sm:$0xff]
        %v408 = vld [vmem:[#allocation5 + $0x250] sm:$0xff]
        %v409 = vld [vmem:[#allocation5 + $0x258] sm:$0xff]
        %v410 = vld [vmem:[#allocation5 + $0x260] sm:$0xff]
        %v411 = vld [vmem:[#allocation5 + $0x268] sm:$0xff]
        %v412 = vld [vmem:[#allocation5 + $0x270] sm:$0xff]
        %v413 = vld [vmem:[#allocation5 + $0x278] sm:$0xff]
        %v414 = vld [vmem:[#allocation5 + $0x280] sm:$0xff]
        %v415 = vld [vmem:[#allocation5 + $0x288] sm:$0xff]
        %v416 = vld [vmem:[#allocation5 + $0x290] sm:$0xff]
        %v417 = vld [vmem:[#allocation5 + $0x298] sm:$0xff]
        %v418 = vld [vmem:[#allocation5 + $0x2a0] sm:$0xff]
        %v419 = vld [vmem:[#allocation5 + $0x2a8] sm:$0xff]
        %v420 = vld [vmem:[#allocation5 + $0x2b0] sm:$0xff]
        %v421 = vld [vmem:[#allocation5 + $0x2b8] sm:$0xff]
        %v422 = vld [vmem:[#allocation5 + $0x2c0] sm:$0xff]
        %v423 = vld [vmem:[#allocation5 + $0x2c8] sm:$0xff]
        %v424 = vld [vmem:[#allocation5 + $0x2d0] sm:$0xff]
        %v425 = vld [vmem:[#allocation5 + $0x2d8] sm:$0xff]
        %v426 = vld [vmem:[#allocation5 + $0x2e0] sm:$0xff]
        %v427 = vld [vmem:[#allocation5 + $0x2e8] sm:$0xff]
        %v428 = vld [vmem:[#allocation5 + $0x2f0] sm:$0xff]
        %v429 = vld [vmem:[#allocation5 + $0x2f8] sm:$0xff]
        %v430 = vld [vmem:[#allocation5 + $0x300] sm:$0xff]
        %v431 = vld [vmem:[#allocation5 + $0x308] sm:$0xff]
        %v432 = vld [vmem:[#allocation5 + $0x310] sm:$0xff]
        %v433 = vld [vmem:[#allocation5 + $0x318] sm:$0xff]
        %v434 = vld [vmem:[#allocation5 + $0x320] sm:$0xff]
        %v435 = vld [vmem:[#allocation5 + $0x328] sm:$0xff]
        %v436 = vld [vmem:[#allocation5 + $0x330] sm:$0xff]
        %v437 = vld [vmem:[#allocation5 + $0x338] sm:$0xff]
        %v438 = vld [vmem:[#allocation5 + $0x340] sm:$0xff]
        %v439 = vld [vmem:[#allocation5 + $0x348] sm:$0xff]
        %v440 = vld [vmem:[#allocation5 + $0x350] sm:$0xff]
        %v441 = vld [vmem:[#allocation5 + $0x358] sm:$0xff]
        %v442 = vld [vmem:[#allocation5 + $0x360] sm:$0xff]
        %v443 = vld [vmem:[#allocation5 + $0x368] sm:$0xff]
        %v444 = vld [vmem:[#allocation5 + $0x370] sm:$0xff]
        %v445 = vld [vmem:[#allocation5 + $0x378] sm:$0xff]
        %v446 = vld [vmem:[#allocation5 + $0x380] sm:$0xff]
        %v447 = vld [vmem:[#allocation5 + $0x388] sm:$0xff]
        %v448 = vld [vmem:[#allocation5 + $0x390] sm:$0xff]
        %v449 = vld [vmem:[#allocation5 + $0x398] sm:$0xff]
        %v450 = vld [vmem:[#allocation5 + $0x3a0] sm:$0xff]
        %v451 = vld [vmem:[#allocation5 + $0x3a8] sm:$0xff]
        %v452 = vld [vmem:[#allocation5 + $0x3b0] sm:$0xff]
        %v453 = vld [vmem:[#allocation5 + $0x3b8] sm:$0xff]
        %v454 = vld [vmem:[#allocation5 + $0x3c0] sm:$0xff]
        %v455 = vld [vmem:[#allocation5 + $0x3c8] sm:$0xff]
        %v456 = vld [vmem:[#allocation5 + $0x3d0] sm:$0xff]
        %v457 = vld [vmem:[#allocation5 + $0x3d8] sm:$0xff]
        %v458 = vld [vmem:[#allocation5 + $0x3e0] sm:$0xff]
        %v459 = vld [vmem:[#allocation5 + $0x3e8] sm:$0xff]
        %v460 = vld [vmem:[#allocation5 + $0x3f0] sm:$0xff]
        %v461 = vld [vmem:[#allocation5 + $0x3f8] sm:$0xff]
        %v462 = vld [vmem:[%s2] sm:$0xf]
        %v464 = vlaneseq
        %v465 = vshrl.u32 %v464, 7
        %v466 = vsub.s32 0, %v465
        %v467 = vrot.slane %v462, %v466
        %v468 = vlaneseq
        %v469 = vshrl.u32 %v468, 7
        %v470 = vsub.s32 1, %v469
        %v471 = vrot.slane %v462, %v470
        %v472 = vlaneseq
        %v473 = vshrl.u32 %v472, 7
        %v474 = vsub.s32 2, %v473
        %v475 = vrot.slane %v462, %v474
        %v476 = vlaneseq
        %v477 = vshrl.u32 %v476, 7
        %v478 = vsub.s32 3, %v477
        %v479 = vrot.slane %v462, %v478
        %484 = vmatprep.subr.mxu0 %v335
        %485 = vmatpush1.msra.mxu0 %v334
        %486 = vmatprep.subr.mxu0 %v339
        %487 = vmatpush1.msra.mxu0 %v338
        %488 = vmatprep.subr.mxu0 %v343
        %489 = vmatpush1.msra.mxu0 %v342
        %490 = vmatprep.subr.mxu0 %v347
        %491 = vmatpush1.msra.mxu0 %v346
        %492 = vmatprep.subr.mxu0 %v351
        %493 = vmatpush1.msra.mxu0 %v350
        %494 = vmatprep.subr.mxu0 %v355
        %495 = vmatpush1.msra.mxu0 %v354
        %496 = vmatprep.subr.mxu0 %v359
        %497 = vmatpush1.msra.mxu0 %v358
        %498 = vmatprep.subr.mxu0 %v363
        %499 = vmatpush1.msra.mxu0 %v362
        %500 = vmatprep.subr.mxu0 %v367
        %501 = vmatpush1.msra.mxu0 %v366
        %502 = vmatprep.subr.mxu0 %v371
        %503 = vmatpush1.msra.mxu0 %v370
        %504 = vmatprep.subr.mxu0 %v375
        %505 = vmatpush1.msra.mxu0 %v374
        %506 = vmatprep.subr.mxu0 %v379
        %507 = vmatpush1.msra.mxu0 %v378
        %508 = vmatprep.subr.mxu0 %v383
        %509 = vmatpush1.msra.mxu0 %v382
        %510 = vmatprep.subr.mxu0 %v387
        %511 = vmatpush1.msra.mxu0 %v386
        %512 = vmatprep.subr.mxu0 %v391
        %513 = vmatpush1.msra.mxu0 %v390
        %514 = vmatprep.subr.mxu0 %v395
        %515 = vmatpush1.msra.mxu0 %v394
        %516 = vmatprep.subr.mxu0 %v399
        %517 = vmatpush1.msra.mxu0 %v398
        %518 = vmatprep.subr.mxu0 %v403
        %519 = vmatpush1.msra.mxu0 %v402
        %520 = vmatprep.subr.mxu0 %v407
        %521 = vmatpush1.msra.mxu0 %v406
        %522 = vmatprep.subr.mxu0 %v411
        %523 = vmatpush1.msra.mxu0 %v410
        %524 = vmatprep.subr.mxu0 %v415
        %525 = vmatpush1.msra.mxu0 %v414
        %526 = vmatprep.subr.mxu0 %v419
        %527 = vmatpush1.msra.mxu0 %v418
        %528 = vmatprep.subr.mxu0 %v423
        %529 = vmatpush1.msra.mxu0 %v422
        %530 = vmatprep.subr.mxu0 %v427
        %531 = vmatpush1.msra.mxu0 %v426
        %532 = vmatprep.subr.mxu0 %v431
        %533 = vmatpush1.msra.mxu0 %v430
        %534 = vmatprep.subr.mxu0 %v435
        %535 = vmatpush1.msra.mxu0 %v434
        %536 = vmatprep.subr.mxu0 %v439
        %537 = vmatpush1.msra.mxu0 %v438
        %538 = vmatprep.subr.mxu0 %v443
        %539 = vmatpush1.msra.mxu0 %v442
        %540 = vmatprep.subr.mxu0 %v447
        %541 = vmatpush1.msra.mxu0 %v446
        %542 = vmatprep.subr.mxu0 %v451
        %543 = vmatpush1.msra.mxu0 %v450
        %544 = vmatprep.subr.mxu0 %v455
        %545 = vmatpush1.msra.mxu0 %v454
        %546 = vmatprep.subr.mxu0 %v459
        %547 = vmatpush1.msra.mxu0 %v458
        %548 = vmatprep.mubr.f32.mxu0 %v309
        %549 = vmatmul.mubr.f32.gmra.mrb[0].mxu0 %v308
        %v550 = vpop.f32.mrb[0].mxu0
        %v551 = vadd.f32 %v467, %v550
        %v552 = vpop.f32.mrb[0].mxu0
        %v553 = vadd.f32 %v471, %v552
        %554 = vmatprep.mubr.f32.mxu0 %v311
        %555 = vmatmul.mubr.f32.gmra.mrb[0].mxu0 %v310
        %v556 = vpop.f32.mrb[0].mxu0
        %v557 = vadd.f32 %v467, %v556
        %v558 = vpop.f32.mrb[0].mxu0
        %v559 = vadd.f32 %v471, %v558
        %560 = vmatprep.mubr.f32.mxu0 %v313
        %561 = vmatmul.mubr.f32.gmra.mrb[0].mxu0 %v312
        %v562 = vpop.f32.mrb[0].mxu0
        %v563 = vadd.f32 %v467, %v562
        %v564 = vpop.f32.mrb[0].mxu0
        %v565 = vadd.f32 %v471, %v564
        %566 = vmatprep.mubr.f32.mxu0 %v315
        %567 = vmatmul.mubr.f32.gmra.mrb[0].mxu0 %v314
        %v568 = vpop.f32.mrb[0].mxu0
        %v569 = vadd.f32 %v467, %v568
        %v570 = vpop.f32.mrb[0].mxu0
        %v571 = vadd.f32 %v471, %v570
        %572 = vmatprep.mubr.f32.mxu0 %v317
        %573 = vmatmul.mubr.f32.gmra.mrb[0].mxu0 %v316
        %v574 = vpop.f32.mrb[0].mxu0
        %v575 = vadd.f32 %v467, %v574
        %v576 = vpop.f32.mrb[0].mxu0
        %v577 = vadd.f32 %v471, %v576
        %578 = vmatprep.mubr.f32.mxu0 %v319
        %579 = vmatmul.mubr.f32.gmra.mrb[0].mxu0 %v318
        %v580 = vpop.f32.mrb[0].mxu0
        %v581 = vadd.f32 %v467, %v580
        %v582 = vpop.f32.mrb[0].mxu0
        %v583 = vadd.f32 %v471, %v582
        %584 = vmatprep.mubr.f32.mxu0 %v321
        %585 = vmatmul.mubr.f32.gmra.mrb[0].mxu0 %v320
        %v586 = vpop.f32.mrb[0].mxu0
        %v587 = vadd.f32 %v467, %v586
        %v588 = vpop.f32.mrb[0].mxu0
        %v589 = vadd.f32 %v471, %v588
        %590 = vmatprep.mubr.f32.mxu0 %v323
        %591 = vmatmul.mubr.f32.gmra.mrb[0].mxu0 %v322
        %v592 = vpop.f32.mrb[0].mxu0
        %v593 = vadd.f32 %v467, %v592
        %v594 = vpop.f32.mrb[0].mxu0
        %v595 = vadd.f32 %v471, %v594
        %596 = vmatprep.mubr.f32.mxu0 %v325
        %597 = vmatmul.mubr.f32.gmra.mrb[0].mxu0 %v324
        %v598 = vpop.f32.mrb[0].mxu0
        %v599 = vadd.f32 %v467, %v598
        %v600 = vpop.f32.mrb[0].mxu0
        %v601 = vadd.f32 %v471, %v600
        %602 = vmatprep.mubr.f32.mxu0 %v327
        %603 = vmatmul.mubr.f32.gmra.mrb[0].mxu0 %v326
        %v604 = vpop.f32.mrb[0].mxu0
        %v605 = vadd.f32 %v467, %v604
        %v606 = vpop.f32.mrb[0].mxu0
        %v607 = vadd.f32 %v471, %v606
        %608 = vmatprep.mubr.f32.mxu0 %v329
        %609 = vmatmul.mubr.f32.gmra.mrb[0].mxu0 %v328
        %v610 = vpop.f32.mrb[0].mxu0
        %v611 = vadd.f32 %v467, %v610
        %v612 = vpop.f32.mrb[0].mxu0
        %v613 = vadd.f32 %v471, %v612
        %614 = vmatprep.mubr.f32.mxu0 %v331
        %615 = vmatmul.mubr.f32.gmra.mrb[0].mxu0 %v330
        %v616 = vpop.f32.mrb[0].mxu0
        %v617 = vadd.f32 %v467, %v616
        %v618 = vpop.f32.mrb[0].mxu0
        %v619 = vadd.f32 %v471, %v618
        %620 = vmatprep.mubr.f32.mxu0 %v333
        %621 = vmatmul.mubr.f32.gmra.mrb[0].mxu0 %v332
        %v622 = vpop.f32.mrb[0].mxu0
        %v623 = vadd.f32 %v467, %v622
        %v624 = vpop.f32.mrb[0].mxu0
        %v625 = vadd.f32 %v471, %v624
        %626 = vdwg.mxu0
        %627 = vmatprep.subr.mxu0 %v337
        %628 = vmatpush1.msra.mxu0 %v336
        %629 = vmatprep.subr.mxu0 %v341
        %630 = vmatpush1.msra.mxu0 %v340
        %631 = vmatprep.subr.mxu0 %v345
        %632 = vmatpush1.msra.mxu0 %v344
        %633 = vmatprep.subr.mxu0 %v349
        %634 = vmatpush1.msra.mxu0 %v348
        %635 = vmatprep.subr.mxu0 %v353
        %636 = vmatpush1.msra.mxu0 %v352
        %637 = vmatprep.subr.mxu0 %v357
        %638 = vmatpush1.msra.mxu0 %v356
        %639 = vmatprep.subr.mxu0 %v361
        %640 = vmatpush1.msra.mxu0 %v360
        %641 = vmatprep.subr.mxu0 %v365
        %642 = vmatpush1.msra.mxu0 %v364
        %643 = vmatprep.subr.mxu0 %v369
        %644 = vmatpush1.msra.mxu0 %v368
        %645 = vmatprep.subr.mxu0 %v373
        %646 = vmatpush1.msra.mxu0 %v372
        %647 = vmatprep.subr.mxu0 %v377
        %648 = vmatpush1.msra.mxu0 %v376
        %649 = vmatprep.subr.mxu0 %v381
        %650 = vmatpush1.msra.mxu0 %v380
        %651 = vmatprep.subr.mxu0 %v385
        %652 = vmatpush1.msra.mxu0 %v384
        %653 = vmatprep.subr.mxu0 %v389
        %654 = vmatpush1.msra.mxu0 %v388
        %655 = vmatprep.subr.mxu0 %v393
        %656 = vmatpush1.msra.mxu0 %v392
        %657 = vmatprep.subr.mxu0 %v397
        %658 = vmatpush1.msra.mxu0 %v396
        %659 = vmatprep.subr.mxu0 %v401
        %660 = vmatpush1.msra.mxu0 %v400
        %661 = vmatprep.subr.mxu0 %v405
        %662 = vmatpush1.msra.mxu0 %v404
        %663 = vmatprep.subr.mxu0 %v409
        %664 = vmatpush1.msra.mxu0 %v408
        %665 = vmatprep.subr.mxu0 %v413
        %666 = vmatpush1.msra.mxu0 %v412
        %667 = vmatprep.subr.mxu0 %v417
        %668 = vmatpush1.msra.mxu0 %v416
        %669 = vmatprep.subr.mxu0 %v421
        %670 = vmatpush1.msra.mxu0 %v420
        %671 = vmatprep.subr.mxu0 %v425
        %672 = vmatpush1.msra.mxu0 %v424
        %673 = vmatprep.subr.mxu0 %v429
        %674 = vmatpush1.msra.mxu0 %v428
        %675 = vmatprep.subr.mxu0 %v433
        %676 = vmatpush1.msra.mxu0 %v432
        %677 = vmatprep.subr.mxu0 %v437
        %678 = vmatpush1.msra.mxu0 %v436
        %679 = vmatprep.subr.mxu0 %v441
        %680 = vmatpush1.msra.mxu0 %v440
        %681 = vmatprep.subr.mxu0 %v445
        %682 = vmatpush1.msra.mxu0 %v444
        %683 = vmatprep.subr.mxu0 %v449
        %684 = vmatpush1.msra.mxu0 %v448
        %685 = vmatprep.subr.mxu0 %v453
        %686 = vmatpush1.msra.mxu0 %v452
        %687 = vmatprep.subr.mxu0 %v457
        %688 = vmatpush1.msra.mxu0 %v456
        %689 = vmatprep.subr.mxu0 %v461
        %690 = vmatpush1.msra.mxu0 %v460
        %691 = vmatprep.mubr.f32.mxu0 %v309
        %692 = vmatmul.mubr.f32.gmra.mrb[0].mxu0 %v308
        %v693 = vpop.f32.mrb[0].mxu0
        %v694 = vadd.f32 %v475, %v693
        %v695 = vpop.f32.mrb[0].mxu0
        %v696 = vadd.f32 %v479, %v695
        %697 = vmatprep.mubr.f32.mxu0 %v311
        %698 = vmatmul.mubr.f32.gmra.mrb[0].mxu0 %v310
        %v699 = vpop.f32.mrb[0].mxu0
        %v700 = vadd.f32 %v475, %v699
        %v701 = vpop.f32.mrb[0].mxu0
        %v702 = vadd.f32 %v479, %v701
        %703 = vmatprep.mubr.f32.mxu0 %v313
        %704 = vmatmul.mubr.f32.gmra.mrb[0].mxu0 %v312
        %v705 = vpop.f32.mrb[0].mxu0
        %v706 = vadd.f32 %v475, %v705
        %v707 = vpop.f32.mrb[0].mxu0
        %v708 = vadd.f32 %v479, %v707
        %709 = vmatprep.mubr.f32.mxu0 %v315
        %710 = vmatmul.mubr.f32.gmra.mrb[0].mxu0 %v314
        %v711 = vpop.f32.mrb[0].mxu0
        %v712 = vadd.f32 %v475, %v711
        %v713 = vpop.f32.mrb[0].mxu0
        %v714 = vadd.f32 %v479, %v713
        %715 = vmatprep.mubr.f32.mxu0 %v317
        %716 = vmatmul.mubr.f32.gmra.mrb[0].mxu0 %v316
        %v717 = vpop.f32.mrb[0].mxu0
        %v718 = vadd.f32 %v475, %v717
        %v719 = vpop.f32.mrb[0].mxu0
        %v720 = vadd.f32 %v479, %v719
        %721 = vmatprep.mubr.f32.mxu0 %v319
        %722 = vmatmul.mubr.f32.gmra.mrb[0].mxu0 %v318
        %v723 = vpop.f32.mrb[0].mxu0
        %v724 = vadd.f32 %v475, %v723
        %v725 = vpop.f32.mrb[0].mxu0
        %v726 = vadd.f32 %v479, %v725
        %727 = vmatprep.mubr.f32.mxu0 %v321
        %728 = vmatmul.mubr.f32.gmra.mrb[0].mxu0 %v320
        %v729 = vpop.f32.mrb[0].mxu0
        %v730 = vadd.f32 %v475, %v729
        %v731 = vpop.f32.mrb[0].mxu0
        %v732 = vadd.f32 %v479, %v731
        %733 = vmatprep.mubr.f32.mxu0 %v323
        %734 = vmatmul.mubr.f32.gmra.mrb[0].mxu0 %v322
        %v735 = vpop.f32.mrb[0].mxu0
        %v736 = vadd.f32 %v475, %v735
        %v737 = vpop.f32.mrb[0].mxu0
        %v738 = vadd.f32 %v479, %v737
        %739 = vmatprep.mubr.f32.mxu0 %v325
        %740 = vmatmul.mubr.f32.gmra.mrb[0].mxu0 %v324
        %v741 = vpop.f32.mrb[0].mxu0
        %v742 = vadd.f32 %v475, %v741
        %v743 = vpop.f32.mrb[0].mxu0
        %v744 = vadd.f32 %v479, %v743
        %745 = vmatprep.mubr.f32.mxu0 %v327
        %746 = vmatmul.mubr.f32.gmra.mrb[0].mxu0 %v326
        %v747 = vpop.f32.mrb[0].mxu0
        %v748 = vadd.f32 %v475, %v747
        %v749 = vpop.f32.mrb[0].mxu0
        %v750 = vadd.f32 %v479, %v749
        %751 = vmatprep.mubr.f32.mxu0 %v329
        %752 = vmatmul.mubr.f32.gmra.mrb[0].mxu0 %v328
        %v753 = vpop.f32.mrb[0].mxu0
        %v754 = vadd.f32 %v475, %v753
        %v755 = vpop.f32.mrb[0].mxu0
        %v756 = vadd.f32 %v479, %v755
        %757 = vmatprep.mubr.f32.mxu0 %v331
        %758 = vmatmul.mubr.f32.gmra.mrb[0].mxu0 %v330
        %v759 = vpop.f32.mrb[0].mxu0
        %v760 = vadd.f32 %v475, %v759
        %v761 = vpop.f32.mrb[0].mxu0
        %v762 = vadd.f32 %v479, %v761
        %763 = vmatprep.mubr.f32.mxu0 %v333
        %764 = vmatmul.mubr.f32.gmra.mrb[0].mxu0 %v332
        %v765 = vpop.f32.mrb[0].mxu0
        %v766 = vadd.f32 %v475, %v765
        %v767 = vpop.f32.mrb[0].mxu0
        %v768 = vadd.f32 %v479, %v767
        %769 = vdwg.mxu0
        %v770 = vmax.f32 %v551, 0.0
        %v771 = vmax.f32 %v553, 0.0
        %v772 = vmax.f32 %v694, 0.0
        %v773 = vmax.f32 %v696, 0.0
        %v774 = vmax.f32 %v557, 0.0
        %v775 = vmax.f32 %v559, 0.0
        %v776 = vmax.f32 %v700, 0.0
        %v777 = vmax.f32 %v702, 0.0
        %v778 = vmax.f32 %v563, 0.0
        %v779 = vmax.f32 %v565, 0.0
        %v780 = vmax.f32 %v706, 0.0
        %v781 = vmax.f32 %v708, 0.0
        %v782 = vmax.f32 %v569, 0.0
        %v783 = vmax.f32 %v571, 0.0
        %v784 = vmax.f32 %v712, 0.0
        %v785 = vmax.f32 %v714, 0.0
        %v786 = vmax.f32 %v575, 0.0
        %v787 = vmax.f32 %v577, 0.0
        %v788 = vmax.f32 %v718, 0.0
        %v789 = vmax.f32 %v720, 0.0
        %v790 = vmax.f32 %v581, 0.0
        %v791 = vmax.f32 %v583, 0.0
        %v792 = vmax.f32 %v724, 0.0
        %v793 = vmax.f32 %v726, 0.0
        %v794 = vmax.f32 %v587, 0.0
        %v795 = vmax.f32 %v589, 0.0
        %v796 = vmax.f32 %v730, 0.0
        %v797 = vmax.f32 %v732, 0.0
        %v798 = vmax.f32 %v593, 0.0
        %v799 = vmax.f32 %v595, 0.0
        %v800 = vmax.f32 %v736, 0.0
        %v801 = vmax.f32 %v738, 0.0
        %v802 = vmax.f32 %v599, 0.0
        %v803 = vmax.f32 %v601, 0.0
        %v804 = vmax.f32 %v742, 0.0
        %v805 = vmax.f32 %v744, 0.0
        %v806 = vmax.f32 %v605, 0.0
        %v807 = vmax.f32 %v607, 0.0
        %v808 = vmax.f32 %v748, 0.0
        %v809 = vmax.f32 %v750, 0.0
        %v810 = vmax.f32 %v611, 0.0
        %v811 = vmax.f32 %v613, 0.0
        %v812 = vmax.f32 %v754, 0.0
        %v813 = vmax.f32 %v756, 0.0
        %v814 = vmax.f32 %v617, 0.0
        %v815 = vmax.f32 %v619, 0.0
        %v816 = vmax.f32 %v760, 0.0
        %v817 = vmax.f32 %v762, 0.0
        %v818 = vmax.f32 %v623, 0.0
        %v819 = vmax.f32 %v625, 0.0
        %v820 = vmax.f32 %v766, 0.0
        %v821 = vmax.f32 %v768, 0.0
        %v822 = vsub.f32 %v308, %v770
        %v823 = vsub.f32 %v309, %v771
        %v824 = vsub.f32 %v310, %v774
        %v825 = vsub.f32 %v311, %v775
        %v826 = vsub.f32 %v312, %v778
        %v827 = vsub.f32 %v313, %v779
        %v828 = vsub.f32 %v314, %v782
        %v829 = vsub.f32 %v315, %v783
        %v830 = vsub.f32 %v316, %v786
        %v831 = vsub.f32 %v317, %v787
        %v832 = vsub.f32 %v318, %v790
        %v833 = vsub.f32 %v319, %v791
        %v834 = vsub.f32 %v320, %v794
        %v835 = vsub.f32 %v321, %v795
        %v836 = vsub.f32 %v322, %v798
        %v837 = vsub.f32 %v323, %v799
        %v838 = vsub.f32 %v324, %v802
        %v839 = vsub.f32 %v325, %v803
        %v840 = vsub.f32 %v326, %v806
        %v841 = vsub.f32 %v327, %v807
        %v842 = vsub.f32 %v328, %v810
        %v843 = vsub.f32 %v329, %v811
        %v844 = vsub.f32 %v330, %v814
        %v845 = vsub.f32 %v331, %v815
        %v846 = vsub.f32 %v332, %v818
        %v847 = vsub.f32 %v333, %v819
        %v848 = vsub.f32 %v822, %v772
        %v849 = vsub.f32 %v823, %v773
        %v850 = vsub.f32 %v824, %v776
        %v851 = vsub.f32 %v825, %v777
        %v852 = vsub.f32 %v826, %v780
        %v853 = vsub.f32 %v827, %v781
        %v854 = vsub.f32 %v828, %v784
        %v855 = vsub.f32 %v829, %v785
        %v856 = vsub.f32 %v830, %v788
        %v857 = vsub.f32 %v831, %v789
        %v858 = vsub.f32 %v832, %v792
        %v859 = vsub.f32 %v833, %v793
        %v860 = vsub.f32 %v834, %v796
        %v861 = vsub.f32 %v835, %v797
        %v862 = vsub.f32 %v836, %v800
        %v863 = vsub.f32 %v837, %v801
        %v864 = vsub.f32 %v838, %v804
        %v865 = vsub.f32 %v839, %v805
        %v866 = vsub.f32 %v840, %v808
        %v867 = vsub.f32 %v841, %v809
        %v868 = vsub.f32 %v842, %v812
        %v869 = vsub.f32 %v843, %v813
        %v870 = vsub.f32 %v844, %v816
        %v871 = vsub.f32 %v845, %v817
        %v872 = vsub.f32 %v846, %v820
        %v873 = vsub.f32 %v847, %v821
        %874 = vst [vmem:[%s269] sm:$0xff] %v848
        %875 = vst [vmem:[%s269 + $0x8] sm:$0xff] %v849
        %876 = vst [vmem:[%s269 + $0x10] sm:$0xff] %v850
        %877 = vst [vmem:[%s269 + $0x18] sm:$0xff] %v851
        %878 = vst [vmem:[%s269 + $0x20] sm:$0xff] %v852
        %879 = vst [vmem:[%s269 + $0x28] sm:$0xff] %v853
        %880 = vst [vmem:[%s269 + $0x30] sm:$0xff] %v854
        %881 = vst [vmem:[%s269 + $0x38] sm:$0xff] %v855
        %882 = vst [vmem:[%s269 + $0x40] sm:$0xff] %v856
        %883 = vst [vmem:[%s269 + $0x48] sm:$0xff] %v857
        %884 = vst [vmem:[%s269 + $0x50] sm:$0xff] %v858
        %885 = vst [vmem:[%s269 + $0x58] sm:$0xff] %v859
        %886 = vst [vmem:[%s269 + $0x60] sm:$0xff] %v860
        %887 = vst [vmem:[%s269 + $0x68] sm:$0xff] %v861
        %888 = vst [vmem:[%s269 + $0x70] sm:$0xff] %v862
        %889 = vst [vmem:[%s269 + $0x78] sm:$0xff] %v863
        %890 = vst [vmem:[%s269 + $0x80] sm:$0xff] %v864
        %891 = vst [vmem:[%s269 + $0x88] sm:$0xff] %v865
        %892 = vst [vmem:[%s269 + $0x90] sm:$0xff] %v866
        %893 = vst [vmem:[%s269 + $0x98] sm:$0xff] %v867
        %894 = vst [vmem:[%s269 + $0xa0] sm:$0xff] %v868
        %895 = vst [vmem:[%s269 + $0xa8] sm:$0xff] %v869
        %896 = vst [vmem:[%s269 + $0xb0] sm:$0xff] %v870
        %897 = vst [vmem:[%s269 + $0xb8] sm:$0xff] %v871
        %898 = vst [vmem:[%s269 + $0xc0] sm:$0xff] %v872
        %899 = vst [vmem:[%s269 + $0xc8] sm:$0xff] %v873
        %900 = vst [vmem:[%s276] sm:$0xff] %v770
        %901 = vst [vmem:[%s276 + $0x8] sm:$0xff] %v771
        %902 = vst [vmem:[%s276 + $0x10] sm:$0xff] %v774
        %903 = vst [vmem:[%s276 + $0x18] sm:$0xff] %v775
        %904 = vst [vmem:[%s276 + $0x20] sm:$0xff] %v778
        %905 = vst [vmem:[%s276 + $0x28] sm:$0xff] %v779
        %906 = vst [vmem:[%s276 + $0x30] sm:$0xff] %v782
        %907 = vst [vmem:[%s276 + $0x38] sm:$0xff] %v783
        %908 = vst [vmem:[%s276 + $0x40] sm:$0xff] %v786
        %909 = vst [vmem:[%s276 + $0x48] sm:$0xff] %v787
        %910 = vst [vmem:[%s276 + $0x50] sm:$0xff] %v790
        %911 = vst [vmem:[%s276 + $0x58] sm:$0xff] %v791
        %912 = vst [vmem:[%s276 + $0x60] sm:$0xff] %v794
        %913 = vst [vmem:[%s276 + $0x68] sm:$0xff] %v795
        %914 = vst [vmem:[%s276 + $0x70] sm:$0xff] %v798
        %915 = vst [vmem:[%s276 + $0x78] sm:$0xff] %v799
        %916 = vst [vmem:[%s276 + $0x80] sm:$0xff] %v802
        %917 = vst [vmem:[%s276 + $0x88] sm:$0xff] %v803
        %918 = vst [vmem:[%s276 + $0x90] sm:$0xff] %v806
        %919 = vst [vmem:[%s276 + $0x98] sm:$0xff] %v807
        %920 = vst [vmem:[%s276 + $0xa0] sm:$0xff] %v810
        %921 = vst [vmem:[%s276 + $0xa8] sm:$0xff] %v811
        %922 = vst [vmem:[%s276 + $0xb0] sm:$0xff] %v814
        %923 = vst [vmem:[%s276 + $0xb8] sm:$0xff] %v815
        %924 = vst [vmem:[%s276 + $0xc0] sm:$0xff] %v818
        %925 = vst [vmem:[%s276 + $0xc8] sm:$0xff] %v819
        %926 = vst [vmem:[%s283] sm:$0xff] %v772
        %927 = vst [vmem:[%s283 + $0x8] sm:$0xff] %v773
        %928 = vst [vmem:[%s283 + $0x10] sm:$0xff] %v776
        %929 = vst [vmem:[%s283 + $0x18] sm:$0xff] %v777
        %930 = vst [vmem:[%s283 + $0x20] sm:$0xff] %v780
        %931 = vst [vmem:[%s283 + $0x28] sm:$0xff] %v781
        %932 = vst [vmem:[%s283 + $0x30] sm:$0xff] %v784
        %933 = vst [vmem:[%s283 + $0x38] sm:$0xff] %v785
        %934 = vst [vmem:[%s283 + $0x40] sm:$0xff] %v788
        %935 = vst [vmem:[%s283 + $0x48] sm:$0xff] %v789
        %936 = vst [vmem:[%s283 + $0x50] sm:$0xff] %v792
        %937 = vst [vmem:[%s283 + $0x58] sm:$0xff] %v793
        %938 = vst [vmem:[%s283 + $0x60] sm:$0xff] %v796
        %939 = vst [vmem:[%s283 + $0x68] sm:$0xff] %v797
        %940 = vst [vmem:[%s283 + $0x70] sm:$0xff] %v800
        %941 = vst [vmem:[%s283 + $0x78] sm:$0xff] %v801
        %942 = vst [vmem:[%s283 + $0x80] sm:$0xff] %v804
        %943 = vst [vmem:[%s283 + $0x88] sm:$0xff] %v805
        %944 = vst [vmem:[%s283 + $0x90] sm:$0xff] %v808
        %945 = vst [vmem:[%s283 + $0x98] sm:$0xff] %v809
        %946 = vst [vmem:[%s283 + $0xa0] sm:$0xff] %v812
        %947 = vst [vmem:[%s283 + $0xa8] sm:$0xff] %v813
        %948 = vst [vmem:[%s283 + $0xb0] sm:$0xff] %v816
        %949 = vst [vmem:[%s283 + $0xb8] sm:$0xff] %v817
        %950 = vst [vmem:[%s283 + $0xc0] sm:$0xff] %v820
        %951 = vst [vmem:[%s283 + $0xc8] sm:$0xff] %v821
        %s952 = sand.u32 %s103, 1
        %s953 = scalar_lea.sflag [#allocation4], %s952
        %s954 = sand.u32 %s103, 1
        %s955 = smul.addr %s954, 208
        %s956 = scalar_lea.vmem [#allocation7], %s955
        %s957 = sand.u32 %s27, 1
        %s958 = scalar_lea.sflag [#allocation9], %s957
        %s959 = sand.u32 %s129, 1
        %s960 = smul.addr %s959, 208
        %s961 = scalar_lea.vmem [#allocation8], %s960
        %s962 = sand.u32 %s27, 1
        %s963 = scalar_lea.sflag [#allocation9], %s962
        %s964 = sand.u32 %s155, 1
        %s965 = smul.addr %s964, 208
        %s966 = scalar_lea.vmem [#allocation10], %s965
        // Predicated region
        $region41: #{frfm_forward.1} parent=31 // pred_check
          %p967 = pneg %p113
        $region42: #{frfm_forward.1} parent=31 // pred_check_branch
          %969 = sbr.rel (%p967) target = $region44
        $region43: #{frfm_forward.1} parent=31 // pred_region
          %s970 = smul.u32 13, %s27
          %s971 = ssub.s32 25, %s970
          %p972 = scmp.lt.s32.totalorder %s971, 13
          %s973 = scalar_select %p972, %s971, 13
          %s974 = smul.u32 128, %s973
          %s975 = smul.u32 %s974, 2
          %s977 = ssub.s32 3328, %s975
          %978 = vsyncadd %s953, %s977
          %p979 = scmp.ne.s32.totalorder 0, %s975
          %s980 = smul.addr %s970, 2
          %s981 = smul.addr %s980, 128
          %s982 = scalar_lea.hbm %s3, %s981
          %s983 = smul.u32 16, %s973
          %s984 = sshll.u32 %s956, 4
          %s985 = int_to_ptr.vmem [resolvable:$true] %s984
          %s986 = sshll.u32 %s983, 4
          %990 = dma.vmem_to_hbm [thread:$0]  (%p979), %s985, %s986, %s982, %s953, 256, 256, 16
        $region44: #{frfm_forward.1} parent=31 // pred_fallthru
          _
        // Predicated region
        $region45: #{frfm_forward.1} parent=31 // pred_check
          %p991 = pneg %p139
        $region46: #{frfm_forward.1} parent=31 // pred_check_branch
          %993 = sbr.rel (%p991) target = $region48
        $region47: #{frfm_forward.1} parent=31 // pred_region
          %s994 = smul.u32 13, %s27
          %s995 = ssub.s32 25, %s994
          %p996 = scmp.lt.s32.totalorder %s995, 13
          %s997 = scalar_select %p996, %s995, 13
          %s998 = smul.u32 128, %s997
          %s999 = smul.u32 %s998, 2
          %s1001 = ssub.s32 3328, %s999
          %1002 = vsyncadd %s958, %s1001
          %p1003 = scmp.ne.s32.totalorder 0, %s999
          %s1004 = smul.addr %s994, 2
          %s1005 = smul.addr %s1004, 128
          %s1006 = scalar_lea.hbm %s4, %s1005
          %s1007 = smul.u32 16, %s997
          %s1008 = sshll.u32 %s961, 4
          %s1009 = int_to_ptr.vmem [resolvable:$true] %s1008
          %s1010 = sshll.u32 %s1007, 4
          %1014 = dma.vmem_to_hbm [thread:$0]  (%p1003), %s1009, %s1010, %s1006, %s958, 256, 256, 16
        $region48: #{frfm_forward.1} parent=31 // pred_fallthru
          _
        // Predicated region
        $region49: #{frfm_forward.1} parent=31 // pred_check
          %p1015 = pneg %p165
        $region50: #{frfm_forward.1} parent=31 // pred_check_branch
          %1017 = sbr.rel (%p1015) target = $region52
        $region51: #{frfm_forward.1} parent=31 // pred_region
          %s1018 = smul.u32 13, %s27
          %s1019 = ssub.s32 25, %s1018
          %p1020 = scmp.lt.s32.totalorder %s1019, 13
          %s1021 = scalar_select %p1020, %s1019, 13
          %s1022 = smul.u32 128, %s1021
          %s1023 = smul.u32 %s1022, 2
          %s1025 = ssub.s32 3328, %s1023
          %1026 = vsyncadd %s963, %s1025
          %p1027 = scmp.ne.s32.totalorder 0, %s1023
          %s1028 = smul.addr %s1018, 2
          %s1029 = smul.addr %s1028, 128
          %s1030 = scalar_lea.hbm %s5, %s1029
          %s1031 = smul.u32 16, %s1021
          %s1032 = sshll.u32 %s966, 4
          %s1033 = int_to_ptr.vmem [resolvable:$true] %s1032
          %s1034 = sshll.u32 %s1031, 4
          %1038 = dma.vmem_to_hbm [thread:$0]  (%p1027), %s1033, %s1034, %s1030, %s963, 256, 256, 16
        $region52: #{frfm_forward.1} parent=31 // pred_fallthru
          _
      $region32: #{frfm_forward.1} parent=5 // pred_fallthru
        _
      %p1039 = scmp.le.s32.totalorder 2, %s22
      // Predicated region
      $region53: #{frfm_forward.1} parent=5 // pred_check
        %p1040 = pneg %p1039
      $region54: #{frfm_forward.1} parent=5 // pred_check_branch
        %1042 = sbr.rel (%p1040) target = $region56
      $region55: #{frfm_forward.1} parent=5 // pred_region
        %s1043 = ssub.s32 %s22, 2
        // Predicated region
        $region57: #{frfm_forward.1} parent=55 // pred_check
          %p1044 = pneg %p119
        $region58: #{frfm_forward.1} parent=55 // pred_check_branch
          %1046 = sbr.rel (%p1044) target = $region60
        $region59: #{frfm_forward.1} parent=55 // pred_region
          %s1047 = sand.u32 %s104, 1
          %s1048 = scalar_lea.sflag [#allocation4], %s1047
          %s1049 = sand.u32 %s104, 1
          %s1050 = smul.addr %s1049, 208
          %s1051 = scalar_lea.vmem [#allocation7], %s1050
          %1052 = dma.done %s1048, 3328
        $region60: #{frfm_forward.1} parent=55 // pred_fallthru
          _
        // Predicated region
        $region61: #{frfm_forward.1} parent=55 // pred_check
          %p1053 = pneg %p145
        $region62: #{frfm_forward.1} parent=55 // pred_check_branch
          %1055 = sbr.rel (%p1053) target = $region64
        $region63: #{frfm_forward.1} parent=55 // pred_region
          %s1056 = sand.u32 %s28, 1
          %s1057 = scalar_lea.sflag [#allocation9], %s1056
          %s1058 = sand.u32 %s130, 1
          %s1059 = smul.addr %s1058, 208
          %s1060 = scalar_lea.vmem [#allocation8], %s1059
          %1061 = dma.done %s1057, 3328
        $region64: #{frfm_forward.1} parent=55 // pred_fallthru
          _
        // Predicated region
        $region65: #{frfm_forward.1} parent=55 // pred_check
          %p1062 = pneg %p171
        $region66: #{frfm_forward.1} parent=55 // pred_check_branch
          %1064 = sbr.rel (%p1062) target = $region68
        $region67: #{frfm_forward.1} parent=55 // pred_region
          %s1065 = sand.u32 %s28, 1
          %s1066 = scalar_lea.sflag [#allocation9], %s1065
          %s1067 = sand.u32 %s156, 1
          %s1068 = smul.addr %s1067, 208
          %s1069 = scalar_lea.vmem [#allocation10], %s1068
          %1070 = dma.done %s1066, 3328
        $region68: #{frfm_forward.1} parent=55 // pred_fallthru
          _
      $region56: #{frfm_forward.1} parent=5 // pred_fallthru
        _
    $region6: #{frfm_forward.1} parent=1 // loop_footer
      %s26 = sadd.s32 1, %s22
    $region7: #{frfm_forward.1} parent=1 // loop_footer_branch
      %21 = sbr.rel target = $region3
    $region8: #{frfm_forward.1} parent=1 // loop_exit
      _
    %1071 = vsyncpa [#allocation3], 1
    %s1072 = scalar_lea.sflag [#allocation3], 1
    %1073 = vsyncpa %s1072, 1
    %1074 = vsyncpa [#allocation6], 1
    %1075 = vsyncpa [#allocation4], 1
    %s1076 = scalar_lea.sflag [#allocation4], 1
    %1077 = vsyncpa %s1076, 1
    %1078 = vsyncpa [#allocation9], 1
    %s1079 = scalar_lea.sflag [#allocation9], 1
    %1080 = vsyncpa %s1079, 1

</llo_original>
